<compile_context>
chip_gen: v5e
topology: v5e:2x2
jax: 0.10.0
libtpu: 0.0.40
codegen_flags: <defaults>
</compile_context>

<pallas_src>
import functools

import jax
import jax.numpy as jnp
from jax.experimental import pallas as pl
from jax.experimental.pallas import tpu as pltpu


def _patch_embed_kernel(x_ref, w_ref, b_ref, o_ref):
    # x_ref: (TM, K) f32 patch pixels (streamed over the grid)
    # w_ref: (K, N)  f32 projection weight (VMEM-resident across grid steps)
    # b_ref: (1, N)  f32 bias            (VMEM-resident across grid steps)
    # o_ref: (TM, N) output tile
    acc = jnp.dot(x_ref[...], w_ref[...], preferred_element_type=jnp.float32)
    o_ref[...] = (acc + b_ref[...]).astype(o_ref.dtype)


def _round_up(x, m):
    return ((x + m - 1) // m) * m


@functools.partial(jax.jit, static_argnames=("patch", "tm", "out_dtype"))
def four_digit_patch_embed(x, conv_weight, conv_bias, patch, tm=4096,
                           out_dtype=jnp.float32):
    """x: (B, 1, H, W) f32. conv_weight: (d_model, 1, p, p). conv_bias: (d_model,).

    Returns (B, (H/p)*(W/p), d_model), matching
    Conv2d(1, d_model, p, p)(x).flatten(2).transpose(1, 2).
    """
    B, C, H, W = x.shape
    assert C == 1
    p = patch
    assert H % p == 0 and W % p == 0
    hp, wp = H // p, W // p
    d_model = conv_weight.shape[0]
    assert d_model % 128 == 0, "keep the output lane-dense"

    M = B * hp * wp          # rows = total number of patches
    K = p * p                # contraction dim (49 for p=7; MXU pads internally)
    N = d_model

    # --- glue: extract non-overlapping patches -> (M, K) ---
    # (B,1,H,W) -> (B,hp,p,wp,p) -> (B,hp,wp,p,p) -> (M, p*p).  f32 operands:
    # the kernel is HBM-bound, so f32 parity with PyTorch Conv2d is free.
    xp = (
        x.reshape(B, hp, p, wp, p)
        .transpose(0, 1, 3, 2, 4)
        .reshape(M, K)
        .astype(jnp.float32)
    )
    w_flat = conv_weight.reshape(d_model, K).T.astype(jnp.float32)   # (K, N)
    b_flat = conv_bias.reshape(1, N).astype(jnp.float32)             # (1, N)

    # --- choose the M tile ---
    # Big tiles amortize the ~0.35us/step grid overhead; also keep >=2-4 grid
    # steps when M allows so the "parallel" axis can shard across v7x's 2 TCs.
    if M >= 4 * 256:
        TM = min(tm, _round_up(pl.cdiv(M, 4), 256))   # >=4 steps, 256-aligned
    elif M >= 16:
        TM = min(tm, _round_up(pl.cdiv(M, 2), 8))     # tiny M: still 2 steps
    else:
        TM = _round_up(max(M, 1), 8)
    TM = max(8, min(TM, tm))

    grid = (pl.cdiv(M, TM),)   # ragged final block is fine: writes are masked

    out_itemsize = jnp.dtype(out_dtype).itemsize
    cost = pl.CostEstimate(
        flops=2 * M * K * N,
        transcendentals=0,
        bytes_accessed=M * K * 4 + K * N * 4 + N * 4 + M * N * out_itemsize,
    )

    out = pl.pallas_call(
        _patch_embed_kernel,
        out_shape=jax.ShapeDtypeStruct((M, N), out_dtype),
        grid=grid,
        in_specs=[
            pl.BlockSpec((TM, K), lambda i: (i, 0)),   # streamed patch rows
            pl.BlockSpec((K, N), lambda i: (0, 0)),    # resident weight
            pl.BlockSpec((1, N), lambda i: (0, 0)),    # resident bias
        ],
        out_specs=pl.BlockSpec((TM, N), lambda i: (i, 0)),
        compiler_params=pltpu.CompilerParams(
            dimension_semantics=("parallel",),          # shard M across TCs (v7x)
            vmem_limit_bytes=32 * 1024 * 1024,
            allow_input_fusion=[True, False, False],    # let XLA fuse patch reshape if it can
        ),
        cost_estimate=cost,
    )(xp, w_flat, b_flat)

    # (B*Np, d_model) -> (B, Np, d_model)  == y.flatten(2).transpose(1, 2)
    return out.reshape(B, hp * wp, d_model)


if __name__ == "__main__":
    # Shapes consistent with the module: 56x56 stacked 4-digit image, patch=7,
    # d_model=256 -> 8x8 = 64 patches per image; batch=2, 1 channel.
    patch = 7
    d_model = 256
    B, H, W = 2, 56, 56

    key = jax.random.PRNGKey(0)
    kx, kw, kb = jax.random.split(key, 3)

    x = jax.random.normal(kx, (B, 1, H, W), dtype=jnp.float32)
    # Conv2d(1, d_model, patch, patch)-shaped synthetic parameters.
    conv_weight = jax.random.normal(kw, (d_model, 1, patch, patch), dtype=jnp.float32) * 0.02
    conv_bias = jax.random.normal(kb, (d_model,), dtype=jnp.float32) * 0.01

    out = four_digit_patch_embed(x, conv_weight, conv_bias, patch)
    out = jax.block_until_ready(out)

    # Reference: f32 lax conv (same as PyTorch Conv2d, NCHW) + flatten/transpose.
    ref = jax.lax.conv_general_dilated(
        x, conv_weight, window_strides=(patch, patch), padding="VALID",
        dimension_numbers=("NCHW", "OIHW", "NCHW"),
    ) + conv_bias.reshape(1, d_model, 1, 1)
    ref = ref.reshape(B, d_model, -1).transpose(0, 2, 1)

    assert out.shape == (B, (H // patch) * (W // patch), d_model)
    assert jnp.allclose(out, ref, atol=2e-3, rtol=2e-3), float(jnp.max(jnp.abs(out - ref)))

    print("KERNEL_OK")
</pallas_src>

<mosaic_0001>
module attributes {stable_mosaic.version = 11 : i64} {
  func.func @_patch_embed_kernel(%arg0: i32, %arg1: memref<64x49xf32, #tpu.memory_space<vmem>>, %arg2: memref<49x256xf32, #tpu.memory_space<vmem>>, %arg3: memref<1x256xf32, #tpu.memory_space<vmem>>, %arg4: memref<64x256xf32, #tpu.memory_space<vmem>>) attributes {dimension_semantics = [#tpu.dimension_semantics<parallel>], iteration_bounds = array<i64: 2>, scalar_prefetch = 0 : i64, scratch_operands = 0 : i64, tpu.core_type = #tpu.core_type<tc>, window_params = [{transform_indices = @transform_0, window_bounds = array<i64: 64, 49>}, {pipeline_mode = #tpu.pipeline_mode<synchronous>, transform_indices = @transform_1, window_bounds = array<i64: 49, 256>}, {pipeline_mode = #tpu.pipeline_mode<synchronous>, transform_indices = @transform_2, window_bounds = array<i64: 1, 256>}, {transform_indices = @transform_3, window_bounds = array<i64: 64, 256>}]} {
    %c0 = arith.constant 0 : index
    %c0_0 = arith.constant 0 : index
    %0 = vector.load %arg1[%c0, %c0_0] : memref<64x49xf32, #tpu.memory_space<vmem>>, vector<64x49xf32>
    %c0_1 = arith.constant 0 : index
    %c0_2 = arith.constant 0 : index
    %1 = vector.load %arg2[%c0_1, %c0_2] : memref<49x256xf32, #tpu.memory_space<vmem>>, vector<49x256xf32>
    %cst = arith.constant dense<0.000000e+00> : vector<64x256xf32>
    %2 = tpu.matmul %0, %1, %cst {dimension_numbers = #tpu.dot_dimension_numbers<[1], [0], [0], [1], [0, 0, 1, 1], [], []>} : vector<64x49xf32>, vector<49x256xf32>, vector<64x256xf32> -> vector<64x256xf32>
    %c0_3 = arith.constant 0 : index
    %c0_4 = arith.constant 0 : index
    %3 = vector.load %arg3[%c0_3, %c0_4] : memref<1x256xf32, #tpu.memory_space<vmem>>, vector<1x256xf32>
    %4 = vector.broadcast %3 : vector<1x256xf32> to vector<64x256xf32>
    %5 = arith.addf %2, %4 : vector<64x256xf32>
    %c0_5 = arith.constant 0 : index
    %c0_6 = arith.constant 0 : index
    %6 = vector.load %arg4[%c0_5, %c0_6] : memref<64x256xf32, #tpu.memory_space<vmem>>, vector<64x256xf32>
    tpu.vector_store %arg4[%c0_5, %c0_6], %5 {strides = array<i32>} : memref<64x256xf32, #tpu.memory_space<vmem>>, vector<64x256xf32>,
    return
  }
  func.func @transform_0(%arg0: i32) -> (i32, i32) {
    %c0_i32 = arith.constant 0 : i32
    %c0_i32_0 = arith.constant 0 : i32
    return %arg0, %c0_i32 : i32, i32
  }
  func.func @transform_1(%arg0: i32) -> (i32, i32) {
    %c0_i32 = arith.constant 0 : i32
    %c0_i32_0 = arith.constant 0 : i32
    %c0_i32_1 = arith.constant 0 : i32
    return %c0_i32, %c0_i32_0 : i32, i32
  }
  func.func @transform_2(%arg0: i32) -> (i32, i32) {
    %c0_i32 = arith.constant 0 : i32
    %c0_i32_0 = arith.constant 0 : i32
    %c0_i32_1 = arith.constant 0 : i32
    return %c0_i32, %c0_i32_0 : i32, i32
  }
  func.func @transform_3(%arg0: i32) -> (i32, i32) {
    %c0_i32 = arith.constant 0 : i32
    %c0_i32_0 = arith.constant 0 : i32
    return %arg0, %c0_i32 : i32, i32
  }
}

</mosaic_0001>

<llo_original>
// kernel: four_digit_patch_embed.1
$region0: #{four_digit_patch_embed.1}
  #allocation0 [shape = 'u32[]', space=smem, size = 0x4, offset = 0x4, fixed_abs, tag = 'smem constant byte address 0x4 - core index']
  #allocation1 [shape = 'u32[72,128]{1,0:T(1,128)}', space=vmem, size = 0x9000, scoped, tag = 'internal scratch']
  %s0 = inlined_call_operand.vmem [shape: f32[128,49], index: 0, kind: input, shape index: {}]
  %s1 = inlined_call_operand.vmem [shape: f32[49,256], index: 1, kind: input, shape index: {}]
  %s2 = inlined_call_operand.vmem [shape: f32[1,256], index: 2, kind: input, shape index: {}]
  %s3 = inlined_call_operand.hbm [shape: f32[128,256], index: 3, kind: output, shape index: {}]
  %s4 = sld [smem:[#allocation0]]
  $region45: #{four_digit_patch_embed.1} parent=0
    _
  %s6 = ssub.s32 1, %s4
  %s7 = scalar_select 0, %s6, %s4
  $region1: #{four_digit_patch_embed.1} parent=0
    #allocation2 [shape = 'u8[131072]{0}', space=vmem, size = 0x20000, scoped, tag = 'output window, operand 0']
    #allocation3 [shape = 's32[2]{0}', space=sflag, size = 0x8, scoped, tag = 'scoped memory for four_digit_patch_embed.1']
    %8 = vsyncpa [#allocation3], 0
    %s9 = scalar_lea.sflag [#allocation3], 1
    %10 = vsyncpa %s9, 0
    loop: start=0, step=1, limit=4
    $region2: #{four_digit_patch_embed.1} parent=1 // loop_pre_header
      _
    $region3: #{four_digit_patch_embed.1} parent=1 // loop_header
      %s12 = sphi 0, %s16
      %p13 = scmp.ge.s32.totalorder %s12, 4
      %s22 = sphi 0, %s24
      %s25 = sphi 0, %s22
      %s26 = sphi 0, %s25
      %s42 = sphi 0, %s26
      %s46 = sphi 0, %s46
      %s48 = sphi 0, %s46
      %s49 = sphi 0, %s48
      %s63 = sphi 0, %s49
      %s67 = sphi 0, %s67
      %s69 = sphi 0, %s67
      %s70 = sphi 0, %s69
      %s84 = sphi 0, %s70
      %s90 = sphi 0, %s92
      %s93 = sphi 0, %s90
      %s94 = sphi 0, %s93
      %s110 = sphi 0, %s94
    $region4: #{four_digit_patch_embed.1} parent=1 // loop_header_branch
      %15 = sbr.rel (%p13) target = $region8
    $region5: #{four_digit_patch_embed.1} parent=1 // loop_body
      %s17 = ssub.s32 %s12, 1
      %s18 = ssub.s32 %s12, 2
      %s19 = sadd.s32 %s12, 1
      %s20 = ssub.s32 %s12, %s19
      %p21 = scmp.eq.s32.totalorder %s20, 0
      %s23 = sadd.s32 %s22, 1
      %s24 = scalar_select %p21, %s22, %s23
      %p27 = pneg %p21
      %p28 = scmp.eq.s32.totalorder %s12, 1
      %p29 = por %p27, %p28
      %p30 = scmp.ne.s32.totalorder %s22, %s25
      %p31 = scmp.eq.s32.totalorder %s12, 0
      %p32 = por %p30, %p31
      %p33 = scmp.ne.s32.totalorder %s22, %s25
      %p34 = scmp.eq.s32.totalorder %s17, 1
      %p35 = por %p33, %p34
      %p36 = scmp.ne.s32.totalorder %s25, %s26
      %p37 = scmp.eq.s32.totalorder %s17, 0
      %p38 = por %p36, %p37
      %p39 = scmp.ne.s32.totalorder %s25, %s26
      %p40 = scmp.eq.s32.totalorder %s18, 1
      %p41 = por %p39, %p40
      %p43 = scmp.ne.s32.totalorder %s26, %s42
      %p44 = scmp.eq.s32.totalorder %s18, 0
      %p45 = por %p43, %p44
      %s47 = sadd.s32 %s46, 1
      %p50 = scmp.eq.s32.totalorder %s12, 1
      %p51 = scmp.ne.s32.totalorder %s46, %s48
      %p52 = scmp.eq.s32.totalorder %s12, 0
      %p53 = por %p51, %p52
      %p54 = scmp.ne.s32.totalorder %s46, %s48
      %p55 = scmp.eq.s32.totalorder %s17, 1
      %p56 = por %p54, %p55
      %p57 = scmp.ne.s32.totalorder %s48, %s49
      %p58 = scmp.eq.s32.totalorder %s17, 0
      %p59 = por %p57, %p58
      %p60 = scmp.ne.s32.totalorder %s48, %s49
      %p61 = scmp.eq.s32.totalorder %s18, 1
      %p62 = por %p60, %p61
      %p64 = scmp.ne.s32.totalorder %s49, %s63
      %p65 = scmp.eq.s32.totalorder %s18, 0
      %p66 = por %p64, %p65
      %s68 = sadd.s32 %s67, 1
      %p71 = scmp.eq.s32.totalorder %s12, 1
      %p72 = scmp.ne.s32.totalorder %s67, %s69
      %p73 = scmp.eq.s32.totalorder %s12, 0
      %p74 = por %p72, %p73
      %p75 = scmp.ne.s32.totalorder %s67, %s69
      %p76 = scmp.eq.s32.totalorder %s17, 1
      %p77 = por %p75, %p76
      %p78 = scmp.ne.s32.totalorder %s69, %s70
      %p79 = scmp.eq.s32.totalorder %s17, 0
      %p80 = por %p78, %p79
      %p81 = scmp.ne.s32.totalorder %s69, %s70
      %p82 = scmp.eq.s32.totalorder %s18, 1
      %p83 = por %p81, %p82
      %p85 = scmp.ne.s32.totalorder %s70, %s84
      %p86 = scmp.eq.s32.totalorder %s18, 0
      %p87 = por %p85, %p86
      %s88 = ssub.s32 %s12, %s19
      %p89 = scmp.eq.s32.totalorder %s88, 0
      %s91 = sadd.s32 %s90, 1
      %s92 = scalar_select %p89, %s90, %s91
      %p95 = pneg %p89
      %p96 = scmp.eq.s32.totalorder %s12, 1
      %p97 = por %p95, %p96
      %p98 = scmp.ne.s32.totalorder %s90, %s93
      %p99 = scmp.eq.s32.totalorder %s12, 0
      %p100 = por %p98, %p99
      %p101 = scmp.ne.s32.totalorder %s90, %s93
      %p102 = scmp.eq.s32.totalorder %s17, 1
      %p103 = por %p101, %p102
      %p104 = scmp.ne.s32.totalorder %s93, %s94
      %p105 = scmp.eq.s32.totalorder %s17, 0
      %p106 = por %p104, %p105
      %p107 = scmp.ne.s32.totalorder %s93, %s94
      %p108 = scmp.eq.s32.totalorder %s18, 1
      %p109 = por %p107, %p108
      %p111 = scmp.ne.s32.totalorder %s94, %s110
      %p112 = scmp.eq.s32.totalorder %s18, 0
      %p113 = por %p111, %p112
      %p114 = scmp.le.s32.totalorder 1, %s12
      %p115 = scmp.lt.s32.totalorder %s12, 3
      %p116 = pnand %p114, %p115
      %p117 = pneg %p116
      // Predicated region
      $region9: #{four_digit_patch_embed.1} parent=5 // pred_check
        _
      $region10: #{four_digit_patch_embed.1} parent=5 // pred_check_branch
        %119 = sbr.rel (%p116) target = $region12
      $region11: #{four_digit_patch_embed.1} parent=5 // pred_region
        %s120 = ssub.s32 %s12, 1
        // Predicated region
        $region13: #{four_digit_patch_embed.1} parent=11 // pred_check
          %p121 = pneg %p59
        $region14: #{four_digit_patch_embed.1} parent=11 // pred_check_branch
          %123 = sbr.rel (%p121) target = $region16
        $region15: #{four_digit_patch_embed.1} parent=11 // pred_region
          _
        $region16: #{four_digit_patch_embed.1} parent=11 // pred_fallthru
          _
        // Predicated region
        $region17: #{four_digit_patch_embed.1} parent=11 // pred_check
          %p124 = pneg %p80
        $region18: #{four_digit_patch_embed.1} parent=11 // pred_check_branch
          %126 = sbr.rel (%p124) target = $region20
        $region19: #{four_digit_patch_embed.1} parent=11 // pred_region
          _
        $region20: #{four_digit_patch_embed.1} parent=11 // pred_fallthru
          _
      $region12: #{four_digit_patch_embed.1} parent=5 // pred_fallthru
        _
      %p127 = scmp.lt.s32.totalorder %s12, 2
      // Predicated region
      $region21: #{four_digit_patch_embed.1} parent=5 // pred_check
        %p128 = pneg %p127
      $region22: #{four_digit_patch_embed.1} parent=5 // pred_check_branch
        %130 = sbr.rel (%p128) target = $region24
      $region23: #{four_digit_patch_embed.1} parent=5 // pred_region
        // Predicated region
        $region25: #{four_digit_patch_embed.1} parent=23 // pred_check
          %p131 = pneg %p32
        $region26: #{four_digit_patch_embed.1} parent=23 // pred_check_branch
          %133 = sbr.rel (%p131) target = $region28
        $region27: #{four_digit_patch_embed.1} parent=23 // pred_region
          %s134 = smul.u32 8, %s12
          %p135 = scmp.lt.s32.totalorder %s134, 15
          %s136 = scalar_select %p135, %s134, 15
          %s137 = smul.addr %s136, 8
          %s138 = scalar_lea.vmem %s0, %s137
          %s139 = smul.u32 8, %s12
        $region28: #{four_digit_patch_embed.1} parent=23 // pred_fallthru
          _
      $region24: #{four_digit_patch_embed.1} parent=5 // pred_fallthru
        _
      %p140 = scmp.le.s32.totalorder 1, %s12
      %p141 = scmp.lt.s32.totalorder %s12, 3
      %p142 = pnand %p140, %p141
      %p143 = pneg %p142
      // Predicated region
      $region29: #{four_digit_patch_embed.1} parent=5 // pred_check
        _
      $region30: #{four_digit_patch_embed.1} parent=5 // pred_check_branch
        %145 = sbr.rel (%p142) target = $region32
      $region31: #{four_digit_patch_embed.1} parent=5 // pred_region
        %s146 = ssub.s32 %s12, 1
        %s147 = smul.u32 8, %s17
        %p148 = scmp.lt.s32.totalorder %s147, 15
        %s149 = scalar_select %p148, %s147, 15
        %s150 = smul.addr %s149, 8
        %s151 = scalar_lea.vmem %s0, %s150
        %p152 = pneg %p38
        %p153 = pneg %p35
        %p154 = pneg %p59
        %p155 = pneg %p56
        %p156 = pneg %p80
        %p157 = pneg %p77
        %p158 = pneg %p106
        %p159 = pneg %p103
        %s160 = sand.u32 %s93, 1
        %s161 = scalar_lea.sflag [#allocation3], %s160
        %s162 = sand.u32 %s93, 1
        %s163 = smul.addr %s162, 128
        %s164 = scalar_lea.vmem [#allocation2], %s163
        %s165 = smul.u32 8, %s17
        %p166 = scmp.lt.s32.totalorder %s165, 15
        %s167 = scalar_select %p166, %s165, 15
        %s168 = smul.addr %s167, 8
        %s169 = scalar_lea.vmem %s0, %s168
        %s170 = smul.u32 8, %s17
        %s171 = smul.u32 8, %s17
        %v172 = vld [vmem:[%s169] sm:$0xff]
        %v173 = vld [vmem:[%s169 + $0x8] sm:$0xff]
        %v174 = vld [vmem:[%s169 + $0x10] sm:$0xff]
        %v175 = vld [vmem:[%s169 + $0x18] sm:$0xff]
        %v176 = vld [vmem:[%s169 + $0x20] sm:$0xff]
        %v177 = vld [vmem:[%s169 + $0x28] sm:$0xff]
        %v178 = vld [vmem:[%s169 + $0x30] sm:$0xff]
        %v179 = vld [vmem:[%s169 + $0x38] sm:$0xff]
        %v180 = vld [vmem:[%s1] sm:$0xff]
        %v181 = vld [vmem:[%s1 + $0x8] sm:$0xff]
        %v182 = vld [vmem:[%s1 + $0x10] sm:$0xff]
        %v183 = vld [vmem:[%s1 + $0x18] sm:$0xff]
        %v184 = vld [vmem:[%s1 + $0x20] sm:$0xff]
        %v185 = vld [vmem:[%s1 + $0x28] sm:$0xff]
        %v186 = vld [vmem:[%s1 + $0x30] sm:$0xff]
        %v187 = vld [vmem:[%s1 + $0x38] sm:$0xff]
        %v188 = vld [vmem:[%s1 + $0x40] sm:$0xff]
        %v189 = vld [vmem:[%s1 + $0x48] sm:$0xff]
        %v190 = vld [vmem:[%s1 + $0x50] sm:$0xff]
        %v191 = vld [vmem:[%s1 + $0x58] sm:$0xff]
        %v192 = vld [vmem:[%s1 + $0x60] sm:$0x1]
        %v193 = vld [vmem:[%s1 + $0x68] sm:$0x1]
        %v194 = vld [vmem:[%s2] sm:$0x3]
        %v196 = vperm.slane %v194, 0
        %v197 = vperm.slane %v194, 1
        %vm200 = vcmask 400384
        %v202 = vsel %vm200, %v172, 0
        %v205 = vsel %vm200, %v173, 0
        %v208 = vsel %vm200, %v174, 0
        %v211 = vsel %vm200, %v175, 0
        %v214 = vsel %vm200, %v176, 0
        %v217 = vsel %vm200, %v177, 0
        %v220 = vsel %vm200, %v178, 0
        %v223 = vsel %vm200, %v179, 0
        %vm225 = vcmask 1040384
        %v227 = vsel %vm225, %v192, 0
        %v230 = vsel %vm225, %v193, 0
        %232 = vmatpush.msra.mxu0 0.0
        %233 = vmatpush.msra.mxu0 0.0
        %234 = vmatpush.msra.mxu0 0.0
        %235 = vmatpush.msra.mxu0 0.0
        %236 = vmatpush.msra.mxu0 0.0
        %237 = vmatpush.msra.mxu0 0.0
        %238 = vmatpush.msra.mxu0 0.0
        %239 = vmatpush.msra.mxu0 0.0
        %240 = vmatpush.msra.mxu0 0.0
        %241 = vmatpush.msra.mxu0 %v227
        %242 = vmatpush.msra.mxu0 %v190
        %243 = vmatpush.msra.mxu0 %v188
        %244 = vmatpush.msra.mxu0 %v186
        %245 = vmatpush.msra.mxu0 %v184
        %246 = vmatpush.msra.mxu0 %v182
        %247 = vmatpush.msra.mxu0 %v180
        %248 = vmatmul.f32.gmra.mxu0 %v202
        %v249 = vpop.f32.mrf.mxu0
        %v250 = vadd.f32 %v196, %v249
        %251 = vmatmul.f32.gmra.mxu0 %v205
        %v252 = vpop.f32.mrf.mxu0
        %v253 = vadd.f32 %v196, %v252
        %254 = vmatmul.f32.gmra.mxu0 %v208
        %v255 = vpop.f32.mrf.mxu0
        %v256 = vadd.f32 %v196, %v255
        %257 = vmatmul.f32.gmra.mxu0 %v211
        %v258 = vpop.f32.mrf.mxu0
        %v259 = vadd.f32 %v196, %v258
        %260 = vmatmul.f32.gmra.mxu0 %v214
        %v261 = vpop.f32.mrf.mxu0
        %v262 = vadd.f32 %v196, %v261
        %263 = vmatmul.f32.gmra.mxu0 %v217
        %v264 = vpop.f32.mrf.mxu0
        %v265 = vadd.f32 %v196, %v264
        %266 = vmatmul.f32.gmra.mxu0 %v220
        %v267 = vpop.f32.mrf.mxu0
        %v268 = vadd.f32 %v196, %v267
        %269 = vmatmul.f32.gmra.mxu0 %v223
        %v270 = vpop.f32.mrf.mxu0
        %v271 = vadd.f32 %v196, %v270
        %272 = vdwg.mxu0
        %273 = vmatpush.msra.mxu0 0.0
        %274 = vmatpush.msra.mxu0 0.0
        %275 = vmatpush.msra.mxu0 0.0
        %276 = vmatpush.msra.mxu0 0.0
        %277 = vmatpush.msra.mxu0 0.0
        %278 = vmatpush.msra.mxu0 0.0
        %279 = vmatpush.msra.mxu0 0.0
        %280 = vmatpush.msra.mxu0 0.0
        %281 = vmatpush.msra.mxu0 0.0
        %282 = vmatpush.msra.mxu0 %v230
        %283 = vmatpush.msra.mxu0 %v191
        %284 = vmatpush.msra.mxu0 %v189
        %285 = vmatpush.msra.mxu0 %v187
        %286 = vmatpush.msra.mxu0 %v185
        %287 = vmatpush.msra.mxu0 %v183
        %288 = vmatpush.msra.mxu0 %v181
        %289 = vmatmul.f32.gmra.mxu0 %v202
        %v290 = vpop.f32.mrf.mxu0
        %v291 = vadd.f32 %v197, %v290
        %292 = vmatmul.f32.gmra.mxu0 %v205
        %v293 = vpop.f32.mrf.mxu0
        %v294 = vadd.f32 %v197, %v293
        %295 = vmatmul.f32.gmra.mxu0 %v208
        %v296 = vpop.f32.mrf.mxu0
        %v297 = vadd.f32 %v197, %v296
        %298 = vmatmul.f32.gmra.mxu0 %v211
        %v299 = vpop.f32.mrf.mxu0
        %v300 = vadd.f32 %v197, %v299
        %301 = vmatmul.f32.gmra.mxu0 %v214
        %v302 = vpop.f32.mrf.mxu0
        %v303 = vadd.f32 %v197, %v302
        %304 = vmatmul.f32.gmra.mxu0 %v217
        %v305 = vpop.f32.mrf.mxu0
        %v306 = vadd.f32 %v197, %v305
        %307 = vmatmul.f32.gmra.mxu0 %v220
        %v308 = vpop.f32.mrf.mxu0
        %v309 = vadd.f32 %v197, %v308
        %310 = vmatmul.f32.gmra.mxu0 %v223
        %v311 = vpop.f32.mrf.mxu0
        %v312 = vadd.f32 %v197, %v311
        %313 = vdwg.mxu0
        %314 = vst [vmem:[%s164] sm:$0xff] %v250
        %315 = vst [vmem:[%s164 + $0x8] sm:$0xff] %v291
        %316 = vst [vmem:[%s164 + $0x10] sm:$0xff] %v253
        %317 = vst [vmem:[%s164 + $0x18] sm:$0xff] %v294
        %318 = vst [vmem:[%s164 + $0x20] sm:$0xff] %v256
        %319 = vst [vmem:[%s164 + $0x28] sm:$0xff] %v297
        %320 = vst [vmem:[%s164 + $0x30] sm:$0xff] %v259
        %321 = vst [vmem:[%s164 + $0x38] sm:$0xff] %v300
        %322 = vst [vmem:[%s164 + $0x40] sm:$0xff] %v262
        %323 = vst [vmem:[%s164 + $0x48] sm:$0xff] %v303
        %324 = vst [vmem:[%s164 + $0x50] sm:$0xff] %v265
        %325 = vst [vmem:[%s164 + $0x58] sm:$0xff] %v306
        %326 = vst [vmem:[%s164 + $0x60] sm:$0xff] %v268
        %327 = vst [vmem:[%s164 + $0x68] sm:$0xff] %v309
        %328 = vst [vmem:[%s164 + $0x70] sm:$0xff] %v271
        %329 = vst [vmem:[%s164 + $0x78] sm:$0xff] %v312
        %s330 = sand.u32 %s93, 1
        %s331 = scalar_lea.sflag [#allocation3], %s330
        %s332 = sand.u32 %s93, 1
        %s333 = smul.addr %s332, 128
        %s334 = scalar_lea.vmem [#allocation2], %s333
        // Predicated region
        $region33: #{four_digit_patch_embed.1} parent=31 // pred_check
          %p335 = pneg %p103
        $region34: #{four_digit_patch_embed.1} parent=31 // pred_check_branch
          %337 = sbr.rel (%p335) target = $region36
        $region35: #{four_digit_patch_embed.1} parent=31 // pred_region
          %s338 = smul.u32 8, %s17
          %340 = vsyncadd %s331, 0
          %s341 = smul.addr %s338, 2
          %s342 = smul.addr %s341, 8
          %s343 = scalar_lea.hbm %s3, %s342
          %s344 = sshll.u32 %s334, 4
          %s345 = int_to_ptr.vmem [resolvable:$true] %s344
          %s346 = sshll.u32 %s343, 4
          %s347 = int_to_ptr.hbm [resolvable:$true] %s346
          %352 = dma.vmem_to_hbm [thread:$0]  %s345, 2048, %s347, %s331, 256, 256, 16
        $region36: #{four_digit_patch_embed.1} parent=31 // pred_fallthru
          _
      $region32: #{four_digit_patch_embed.1} parent=5 // pred_fallthru
        _
      %p353 = scmp.le.s32.totalorder 2, %s12
      // Predicated region
      $region37: #{four_digit_patch_embed.1} parent=5 // pred_check
        %p354 = pneg %p353
      $region38: #{four_digit_patch_embed.1} parent=5 // pred_check_branch
        %356 = sbr.rel (%p354) target = $region40
      $region39: #{four_digit_patch_embed.1} parent=5 // pred_region
        %s357 = ssub.s32 %s12, 2
        // Predicated region
        $region41: #{four_digit_patch_embed.1} parent=39 // pred_check
          %p358 = pneg %p109
        $region42: #{four_digit_patch_embed.1} parent=39 // pred_check_branch
          %360 = sbr.rel (%p358) target = $region44
        $region43: #{four_digit_patch_embed.1} parent=39 // pred_region
          %s361 = sand.u32 %s94, 1
          %s362 = scalar_lea.sflag [#allocation3], %s361
          %s363 = sand.u32 %s94, 1
          %s364 = smul.addr %s363, 128
          %s365 = scalar_lea.vmem [#allocation2], %s364
          %367 = dma.done %s362, 2048
        $region44: #{four_digit_patch_embed.1} parent=39 // pred_fallthru
          _
      $region40: #{four_digit_patch_embed.1} parent=5 // pred_fallthru
        _
    $region6: #{four_digit_patch_embed.1} parent=1 // loop_footer
      %s16 = sadd.s32 1, %s12
    $region7: #{four_digit_patch_embed.1} parent=1 // loop_footer_branch
      %11 = sbr.rel target = $region3
    $region8: #{four_digit_patch_embed.1} parent=1 // loop_exit
      _
    %368 = vsyncpa [#allocation3], 1
    %s369 = scalar_lea.sflag [#allocation3], 1
    %370 = vsyncpa %s369, 1

</llo_original>
